<compile_context>
chip_gen: v7x
topology: tpu7x:2x2x1
jax: 0.10.0
libtpu: 0.0.40
codegen_flags: <defaults>
</compile_context>

<pallas_src>
import functools

import jax
import jax.numpy as jnp
import numpy as np
from jax.experimental import pallas as pl
from jax.experimental.pallas import tpu as pltpu


# ---------------------------------------------------------------------------
# helpers
# ---------------------------------------------------------------------------
def _round_up(a, b):
    return (a + b - 1) // b * b


def _vmem_capacity_bytes():
    try:
        cap = int(pltpu.get_tpu_info().vmem_capacity_bytes)
        if cap > 0:
            return cap
    except Exception:
        pass
    return 64 * 1024 * 1024  # conservative (v7x per-TC) fallback


def _pick_tile(hw, rows, itemsize, n_buffers, budget_bytes):
    """Largest multiple-of-128 HW tile s.t. n_buffers * rows * tile * itemsize <= budget."""
    hw128 = _round_up(hw, 128)
    denom = max(1, n_buffers * rows * itemsize)
    tile = (budget_bytes // denom) // 128 * 128
    tile = max(128, tile)
    return int(min(tile, hw128))


# ---------------------------------------------------------------------------
# fused fast path: whole x resident in VMEM (one HBM read, one HBM write)
# ---------------------------------------------------------------------------
def _fused_kernel(x_ref, wt_ref, b_ref, o_ref, *, inv_hw):
    # x_ref: (N, C, HW) native   wt_ref: (C_in, C_out) f32   b_ref: (1, C) f32
    x = x_ref[...]
    y = jnp.sum(x.astype(jnp.float32), axis=-1) * inv_hw               # (N, C) mean
    z = jnp.dot(y, wt_ref[...], preferred_element_type=jnp.float32) + b_ref[...]
    s = (1.0 + jax.nn.sigmoid(z)).astype(x.dtype)                      # (N, C)
    o_ref[...] = x * s[:, :, None]


# ---------------------------------------------------------------------------
# pass 1: pooled mean -> center-tap matvec -> 1 + sigmoid   (s of shape (N, C, 1))
# ---------------------------------------------------------------------------
def _pool_scale_kernel(x_ref, w_ref, b_ref, s_ref, acc_ref, *, inv_hw, hw, tile):
    # grid: (N, HW_tiles); axis 0 "parallel", axis 1 "arbitrary" (reduction)
    # x_ref: (C, tile) native    w_ref: (C_out, C_in) f32   b_ref: (C, 1) f32
    # s_ref: (C, 1) x.dtype      acc_ref: (C, 128) f32 carried across HW tiles
    t = pl.program_id(1)

    @pl.when(t == 0)
    def _init():
        acc_ref[...] = jnp.zeros_like(acc_ref)

    C = x_ref.shape[0]
    n_chunks = tile // 128
    base = t * tile
    # hoisted lane-index iota (don't rebuild the broadcast inside the loop)
    lane = jax.lax.broadcasted_iota(jnp.int32, (C, 128), 1)

    def chunk_body(j, carry):
        off = pl.multiple_of(j * 128, 128)
        chunk = x_ref[:, pl.ds(off, 128)].astype(jnp.float32)
        rem = hw - base - j * 128            # valid lanes left in this chunk
        acc_ref[...] += jnp.where(lane < rem, chunk, 0.0)
        return carry

    jax.lax.fori_loop(0, n_chunks, chunk_body, jnp.int32(0), unroll=8)

    @pl.when(t == pl.num_programs(1) - 1)
    def _finalize():
        y = jnp.sum(acc_ref[...], axis=-1, keepdims=True) * inv_hw     # (C_in, 1) mean
        # 3x3 conv on a 1x1 zero-padded map == center-tap matvec + bias
        z = jnp.dot(w_ref[...], y, preferred_element_type=jnp.float32) + b_ref[...]
        s_ref[...] = (1.0 + jax.nn.sigmoid(z)).astype(s_ref.dtype)     # pre-folded (1+s)


# ---------------------------------------------------------------------------
# pass 2: lane-dense streaming  out = x * s    (single multiply per element)
# ---------------------------------------------------------------------------
def _scale_kernel(x_ref, s_ref, o_ref):
    # x_ref: (C, T) native   s_ref: (C, 1) native (already 1+sigmoid)   o_ref: (C, T)
    o_ref[...] = x_ref[...] * s_ref[...]


# ---------------------------------------------------------------------------
# wrapper
# ---------------------------------------------------------------------------
def scam_forward(x, w_center, bias, *, force_two_pass=False, tile_override=None):
    """x: (N, C, H, W); w_center: (C_out, C_in) center tap of the 3x3 conv; bias: (C,)."""
    N, C, H, W = x.shape
    hw = H * W
    itemsize = jnp.dtype(x.dtype).itemsize
    x_flat = x.reshape(N, C, hw)

    cap = _vmem_capacity_bytes()
    budget = min(3 * cap // 8, 48 * 1024 * 1024)      # live-buffer budget per pass
    vmem_limit = min(3 * cap // 4, 96 * 1024 * 1024)  # scoped VMEM limit for the compiler

    x_bytes = N * C * hw * itemsize

    # ---- fused single-call fast path: read x once, write out once ----
    if (not force_two_pass) and x_bytes <= min(budget // 4, 4 * 1024 * 1024):
        wt = w_center.T.astype(jnp.float32)            # (C_in, C_out)
        b_row = bias.reshape(1, C).astype(jnp.float32)
        out_flat = pl.pallas_call(
            functools.partial(_fused_kernel, inv_hw=1.0 / hw),
            out_shape=jax.ShapeDtypeStruct((N, C, hw), x.dtype),
            compiler_params=pltpu.CompilerParams(vmem_limit_bytes=vmem_limit),
        )(x_flat, wt, b_row)
        return out_flat.reshape(N, C, H, W)

    # ---- tiled two-pass path (no padding: ragged tails handled in-kernel) ----
    # pass-1 fixed VMEM: (C,128) f32 accumulator + (C,C)+(C,1) f32 params
    fixed1 = C * 128 * 4 + C * C * 4 + C * 4
    t1 = _pick_tile(hw, C, itemsize, 2, max(budget - fixed1, 0))       # 2 input buffers
    t2 = _pick_tile(hw, C, itemsize, 4, budget)                        # 2 in + 2 out buffers
    if N == 1:
        # make sure v7x's two TensorCores both get work in pass 2
        t2 = min(t2, max(128, _round_up(-(-hw // 2), 128)))
    if tile_override is not None:
        t1 = max(128, min(t1, (tile_override // 128) * 128))
        t2 = max(128, min(t2, (tile_override // 128) * 128))
    # TODO(synk): when N == 1 on v7x, pass 1 could additionally split HW into two parallel
    # halves with partial-sum outputs combined in a tiny epilogue; not implemented here.

    w_f = w_center.astype(jnp.float32)                 # (C_out, C_in), untransposed
    b_col = bias.reshape(C, 1).astype(jnp.float32)

    # pass 1: per-image scale s = 1 + sigmoid(conv(mean(x)))  -> (N, C, 1) in x.dtype
    s = pl.pallas_call(
        functools.partial(_pool_scale_kernel, inv_hw=1.0 / hw, hw=hw, tile=t1),
        out_shape=jax.ShapeDtypeStruct((N, C, 1), x.dtype),
        grid_spec=pltpu.PrefetchScalarGridSpec(
            num_scalar_prefetch=0,
            grid=(N, pl.cdiv(hw, t1)),
            in_specs=[
                pl.BlockSpec((None, C, t1), lambda n, t: (n, 0, t)),
                pl.BlockSpec((C, C), lambda n, t: (0, 0)),
                pl.BlockSpec((C, 1), lambda n, t: (0, 0)),
            ],
            out_specs=pl.BlockSpec((None, C, 1), lambda n, t: (n, 0, 0)),
            scratch_shapes=[pltpu.VMEM((C, 128), jnp.float32)],
        ),
        compiler_params=pltpu.CompilerParams(
            dimension_semantics=("parallel", "arbitrary"),
            vmem_limit_bytes=vmem_limit),
    )(x_flat, w_f, b_col)

    # pass 2: out = x * s, lane-dense, both grid axes parallel
    out_flat = pl.pallas_call(
        _scale_kernel,
        out_shape=jax.ShapeDtypeStruct((N, C, hw), x.dtype),
        grid_spec=pltpu.PrefetchScalarGridSpec(
            num_scalar_prefetch=0,
            grid=(N, pl.cdiv(hw, t2)),
            in_specs=[
                pl.BlockSpec((None, C, t2), lambda n, t: (n, 0, t)),
                pl.BlockSpec((None, C, 1), lambda n, t: (n, 0, 0)),
            ],
            out_specs=pl.BlockSpec((None, C, t2), lambda n, t: (n, 0, t)),
        ),
        compiler_params=pltpu.CompilerParams(
            dimension_semantics=("parallel", "parallel"),
            vmem_limit_bytes=vmem_limit),
    )(x_flat, s)

    return out_flat.reshape(N, C, H, W)


# ---------------------------------------------------------------------------
# parameter construction (weight-norm'd Conv2d(channel, channel, 3))
# ---------------------------------------------------------------------------
def make_params(channel, key):
    """Weight norm: w = g * v / ||v|| with g initialised to ||v|| => w == v at init.
    Reduced to the center tap kernel[:, :, 1, 1] since the conv input is a 1x1 map."""
    kv, kb = jax.random.split(key)
    fan_in = channel * 3 * 3
    bound = 1.0 / np.sqrt(fan_in)
    v = jax.random.uniform(kv, (channel, channel, 3, 3),
                           minval=-bound, maxval=bound, dtype=jnp.float32)
    bias = jax.random.uniform(kb, (channel,),
                              minval=-bound, maxval=bound, dtype=jnp.float32)
    norm = jnp.sqrt(jnp.sum(v * v, axis=(1, 2, 3), keepdims=True))
    w = norm * v / norm                                # == v at init (explicit for faithfulness)
    w_center = w[:, :, 1, 1]                           # (C_out, C_in)
    return w_center, bias


def scam_reference(x, w_center, bias):
    y = jnp.mean(x, axis=(2, 3))                       # (N, C)
    z = y @ w_center.T + bias[None, :]
    s = jax.nn.sigmoid(z)[:, :, None, None]
    return x * s + x


if __name__ == "__main__":
    key = jax.random.PRNGKey(0)
    kx, kp, kx2, kx3 = jax.random.split(key, 4)

    # canonical small shape -> exercises the fused single-call fast path
    N, C, H, W = 2, 4, 16, 16
    x = jax.random.normal(kx, (N, C, H, W), dtype=jnp.float32)
    w_center, bias = make_params(C, kp)
    out = jax.block_until_ready(scam_forward(x, w_center, bias))
    ref = scam_reference(x, w_center, bias)
    np.testing.assert_allclose(np.asarray(out), np.asarray(ref), rtol=1e-5, atol=1e-5)

    # ragged spatial size (HW % 128 != 0) -> tiled two-pass path with masked tail
    x2 = jax.random.normal(kx2, (2, 4, 13, 13), dtype=jnp.float32)
    out2 = jax.block_until_ready(scam_forward(x2, w_center, bias, force_two_pass=True))
    ref2 = scam_reference(x2, w_center, bias)
    np.testing.assert_allclose(np.asarray(out2), np.asarray(ref2), rtol=1e-5, atol=1e-5)

    # multi-tile reduction (several HW tiles per image, partial last tile)
    x3 = jax.random.normal(kx3, (2, 8, 40, 40), dtype=jnp.float32)
    w3, b3 = make_params(8, kp)
    out3 = jax.block_until_ready(
        scam_forward(x3, w3, b3, force_two_pass=True, tile_override=512))
    ref3 = scam_reference(x3, w3, b3)
    np.testing.assert_allclose(np.asarray(out3), np.asarray(ref3), rtol=1e-5, atol=1e-5)

    print("KERNEL_OK")
</pallas_src>

<mosaic_0001>
module attributes {stable_mosaic.version = 11 : i64} {
  func.func @_fused_kernel(%arg0: memref<2x4x256xf32, #tpu.memory_space<vmem>>, %arg1: memref<4x4xf32, #tpu.memory_space<vmem>>, %arg2: memref<1x4xf32, #tpu.memory_space<vmem>>, %arg3: memref<2x4x256xf32, #tpu.memory_space<vmem>>) attributes {dimension_semantics = [], scalar_prefetch = 0 : i64, scratch_operands = 0 : i64, tpu.core_type = #tpu.core_type<tc>} {
    %c0 = arith.constant 0 : index
    %c0_0 = arith.constant 0 : index
    %c0_1 = arith.constant 0 : index
    %0 = vector.load %arg0[%c0, %c0_0, %c0_1] : memref<2x4x256xf32, #tpu.memory_space<vmem>>, vector<2x4x256xf32>
    %cst = arith.constant dense<0.000000e+00> : vector<2x4xf32>
    %1 = vector.multi_reduction <add>, %0, %cst [2] : vector<2x4x256xf32> to vector<2x4xf32>
    %cst_2 = arith.constant 3.906250e-03 : f32
    %2 = vector.broadcast %cst_2 : f32 to vector<2x4xf32>
    %3 = arith.mulf %1, %2 : vector<2x4xf32>
    %c0_3 = arith.constant 0 : index
    %c0_4 = arith.constant 0 : index
    %4 = vector.load %arg1[%c0_3, %c0_4] : memref<4x4xf32, #tpu.memory_space<vmem>>, vector<4x4xf32>
    %cst_5 = arith.constant dense<0.000000e+00> : vector<2x4xf32>
    %5 = tpu.matmul %3, %4, %cst_5 {dimension_numbers = #tpu.dot_dimension_numbers<[1], [0], [0], [1], [0, 0, 1, 1], [], []>} : vector<2x4xf32>, vector<4x4xf32>, vector<2x4xf32> -> vector<2x4xf32>
    %c0_6 = arith.constant 0 : index
    %c0_7 = arith.constant 0 : index
    %6 = vector.load %arg2[%c0_6, %c0_7] : memref<1x4xf32, #tpu.memory_space<vmem>>, vector<1x4xf32>
    %7 = vector.broadcast %6 : vector<1x4xf32> to vector<2x4xf32>
    %8 = arith.addf %5, %7 : vector<2x4xf32>
    %9 = arith.negf %8 : vector<2x4xf32>
    %10 = math.exp %9 : vector<2x4xf32>
    %cst_8 = arith.constant 1.000000e+00 : f32
    %11 = vector.broadcast %cst_8 : f32 to vector<2x4xf32>
    %12 = arith.addf %11, %10 : vector<2x4xf32>
    %13 = arith.divf %11, %12 : vector<2x4xf32>
    %cst_9 = arith.constant 1.000000e+00 : f32
    %14 = vector.broadcast %cst_9 : f32 to vector<2x4xf32>
    %15 = arith.addf %14, %13 : vector<2x4xf32>
    %16 = vector.shape_cast %15 : vector<2x4xf32> to vector<2x4x1xf32>
    %17 = vector.broadcast %16 : vector<2x4x1xf32> to vector<2x4x256xf32>
    %18 = arith.mulf %0, %17 : vector<2x4x256xf32>
    %c0_10 = arith.constant 0 : index
    %c0_11 = arith.constant 0 : index
    %c0_12 = arith.constant 0 : index
    %19 = vector.load %arg3[%c0_10, %c0_11, %c0_12] : memref<2x4x256xf32, #tpu.memory_space<vmem>>, vector<2x4x256xf32>
    tpu.vector_store %arg3[%c0_10, %c0_11, %c0_12], %18 {strides = array<i32>} : memref<2x4x256xf32, #tpu.memory_space<vmem>>, vector<2x4x256xf32>,
    return
  }
}

</mosaic_0001>

<llo_original>
// kernel: tpu_custom_call.1
$region0: #{tpu_custom_call.1}
  #allocation0 [shape = 'u32[]', space=smem, size = 0x4, offset = 0x4, fixed_abs, tag = 'smem constant byte address 0x4 - core index']
  #allocation1 [shape = 'u32[144,128]{1,0:T(1,128)}', space=vmem, size = 0x12000, scoped, tag = 'internal scratch']
  %s0 = inlined_call_operand.hbm [shape: f32[2,4,256], index: 0, kind: input, shape index: {}]
  %s1 = inlined_call_operand.hbm [shape: f32[4,4], index: 1, kind: input, shape index: {}]
  %s2 = inlined_call_operand.vmem [shape: f32[1,4], index: 2, kind: input, shape index: {}]
  %s3 = inlined_call_operand.hbm [shape: f32[2,4,256], index: 3, kind: output, shape index: {}]
  %s4 = sld [smem:[#allocation0]]
  $region30: #{tpu_custom_call.1} parent=0
    _
  %s6 = ssub.s32 1, %s4
  %s7 = scalar_select 0, %s6, %s4
  $region1: #{tpu_custom_call.1} parent=0
    #allocation2 [shape = 'u8[8192]{0}', space=vmem, size = 0x2000, scoped, tag = 'input window, operand 0, single buffered']
    #allocation3 [shape = 's32[1]{0}', space=sflag, size = 0x4, scoped, tag = 'scoped memory for tpu_custom_call.1']
    #allocation4 [shape = 's32[1]{0}', space=sflag, size = 0x4, scoped, tag = 'scoped memory for tpu_custom_call.1']
    #allocation5 [shape = 'u8[2048]{0}', space=vmem, size = 0x800, scoped, tag = 'input window, operand 1, single buffered']
    #allocation6 [shape = 's32[1]{0}', space=sflag, size = 0x4, scoped, tag = 'scoped memory for tpu_custom_call.1']
    #allocation7 [shape = 'u8[8192]{0}', space=vmem, size = 0x2000, scoped, tag = 'output window, operand 0, single buffered']
    %8 = vsyncpa [#allocation3], 0
    %9 = vsyncpa [#allocation6], 0
    %10 = vsyncpa [#allocation4], 0
    // Predicated region
    $region2: #{tpu_custom_call.1} parent=1 // pred_check
      _
    $region3: #{tpu_custom_call.1} parent=1 // pred_check_branch
      %12 = sbr.rel (0) target = $region5
    $region4: #{tpu_custom_call.1} parent=1 // pred_region
      %s14 = ssub.s32 256, 256
      %15 = vsyncadd [#allocation3], %s14
      %s16 = sshll.u32 [#allocation2], 4
      %s17 = int_to_ptr.vmem [resolvable:$true] %s16
      %22 = dma.hbm_to_vmem [thread:$0]  %s0, 256, %s17, [#allocation3], 128, 128, 8
    $region5: #{tpu_custom_call.1} parent=1 // pred_fallthru
      _
    // Predicated region
    $region6: #{tpu_custom_call.1} parent=1 // pred_check
      _
    $region7: #{tpu_custom_call.1} parent=1 // pred_check_branch
      %24 = sbr.rel (0) target = $region9
    $region8: #{tpu_custom_call.1} parent=1 // pred_region
      %s26 = ssub.s32 64, 64
      %27 = vsyncadd [#allocation6], %s26
      %s29 = sshll.u32 [#allocation5], 4
      %s30 = int_to_ptr.vmem [resolvable:$true] %s29
      %32 = dma.hbm_to_vmem [thread:$0]  %s1, 64, %s30, [#allocation6]
    $region9: #{tpu_custom_call.1} parent=1 // pred_fallthru
      _
    // Predicated region
    $region10: #{tpu_custom_call.1} parent=1 // pred_check
      _
    $region11: #{tpu_custom_call.1} parent=1 // pred_check_branch
      %34 = sbr.rel (0) target = $region13
    $region12: #{tpu_custom_call.1} parent=1 // pred_region
      _
    $region13: #{tpu_custom_call.1} parent=1 // pred_fallthru
      _
    // Predicated region
    $region14: #{tpu_custom_call.1} parent=1 // pred_check
      _
    $region15: #{tpu_custom_call.1} parent=1 // pred_check_branch
      %36 = sbr.rel (0) target = $region17
    $region16: #{tpu_custom_call.1} parent=1 // pred_region
      %37 = dma.done [#allocation3], 256
    $region17: #{tpu_custom_call.1} parent=1 // pred_fallthru
      _
    // Predicated region
    $region18: #{tpu_custom_call.1} parent=1 // pred_check
      _
    $region19: #{tpu_custom_call.1} parent=1 // pred_check_branch
      %39 = sbr.rel (0) target = $region21
    $region20: #{tpu_custom_call.1} parent=1 // pred_region
      %40 = dma.done [#allocation6], 64
    $region21: #{tpu_custom_call.1} parent=1 // pred_fallthru
      _
    %v41 = vld [vmem:[#allocation2] sm:$0xff]
    %v42 = vld [vmem:[#allocation2 + $0x8] sm:$0xff]
    %v45 = vcombine.high %v41, %v41
    %v46 = vcombine.high %v42, %v42
    %vm49 = vcmask 1043456
    %v50 = vsel %vm49, %v41, 0.0
    %v51 = vsel %vm49, %v45, 0.0
    %v52 = vadd.f32 %v50, %v51
    %53 = vadd.xlane.f32.xlu0 %v52
    %v54 = vpop.xlane.xlu0 %53
    %v55 = vsel %vm49, %v42, 0.0
    %v56 = vsel %vm49, %v46, 0.0
    %v57 = vadd.f32 %v55, %v56
    %58 = vadd.xlane.f32.xlu0 %v57
    %v59 = vpop.xlane.xlu0 %58
    %v60 = vmul.f32 %v54, 0.00390625
    %v61 = vmul.f32 %v59, 0.00390625
    %v62 = vld [vmem:[#allocation5] sm:$0xf]
    %v63 = vld [vmem:[%s2] sm:$0x1]
    %v65 = vlaneseq
    %v66 = vshrl.u32 %v65, 7
    %v67 = vsub.s32 0, %v66
    %v68 = vrot.slane %v63, %v67
    %v72 = vlaneseq
    %v73 = vand.u32 %v72, 127
    %v74 = vlaneseq
    %v75 = vshrl.u32 %v74, 7
    %v76 = vsub.s32 %v73, %v75
    %v77 = vrot.slane %v60, %v76
    %v78 = vlaneseq
    %v79 = vshrl.u32 %v78, 7
    %v80 = vsub.s32 %v73, %v79
    %v81 = vrot.slane %v61, %v80
    %vm82 = vcmask 1041409
    %v83 = vsel %vm82, %v81, %v77
    %vm84 = vcmask 31744
    %v85 = vsel %vm84, %v83, 0
    %v88 = vsel %vm49, %v62, 0
    %90 = vmatprep.subr.mxu0 0.0
    %91 = vmatpush1.msra.mxu0 %v88
    %92 = vmatprep.subr.mxu0 0.0
    %93 = vmatpush1.msra.mxu0 0.0
    %94 = vmatprep.subr.mxu0 0.0
    %95 = vmatpush1.msra.mxu0 0.0
    %96 = vmatprep.subr.mxu0 0.0
    %97 = vmatpush1.msra.mxu0 0.0
    %98 = vmatprep.subr.mxu0 0.0
    %99 = vmatpush1.msra.mxu0 0.0
    %100 = vmatprep.subr.mxu0 0.0
    %101 = vmatpush1.msra.mxu0 0.0
    %102 = vmatprep.subr.mxu0 0.0
    %103 = vmatpush1.msra.mxu0 0.0
    %104 = vmatprep.subr.mxu0 0.0
    %105 = vmatpush1.msra.mxu0 0.0
    %106 = vmatprep.subr.mxu0 0.0
    %107 = vmatpush1.msra.mxu0 0.0
    %108 = vmatprep.subr.mxu0 0.0
    %109 = vmatpush1.msra.mxu0 0.0
    %110 = vmatprep.subr.mxu0 0.0
    %111 = vmatpush1.msra.mxu0 0.0
    %112 = vmatprep.subr.mxu0 0.0
    %113 = vmatpush1.msra.mxu0 0.0
    %114 = vmatprep.subr.mxu0 0.0
    %115 = vmatpush1.msra.mxu0 0.0
    %116 = vmatprep.subr.mxu0 0.0
    %117 = vmatpush1.msra.mxu0 0.0
    %118 = vmatprep.subr.mxu0 0.0
    %119 = vmatpush1.msra.mxu0 0.0
    %120 = vmatprep.subr.mxu0 0.0
    %121 = vmatpush1.msra.mxu0 0.0
    %122 = vmatprep.subr.mxu0 0.0
    %123 = vmatpush1.msra.mxu0 0.0
    %124 = vmatprep.subr.mxu0 0.0
    %125 = vmatpush1.msra.mxu0 0.0
    %126 = vmatprep.subr.mxu0 0.0
    %127 = vmatpush1.msra.mxu0 0.0
    %128 = vmatprep.subr.mxu0 0.0
    %129 = vmatpush1.msra.mxu0 0.0
    %130 = vmatprep.subr.mxu0 0.0
    %131 = vmatpush1.msra.mxu0 0.0
    %132 = vmatprep.subr.mxu0 0.0
    %133 = vmatpush1.msra.mxu0 0.0
    %134 = vmatprep.subr.mxu0 0.0
    %135 = vmatpush1.msra.mxu0 0.0
    %136 = vmatprep.subr.mxu0 0.0
    %137 = vmatpush1.msra.mxu0 0.0
    %138 = vmatprep.subr.mxu0 0.0
    %139 = vmatpush1.msra.mxu0 0.0
    %140 = vmatprep.subr.mxu0 0.0
    %141 = vmatpush1.msra.mxu0 0.0
    %142 = vmatprep.subr.mxu0 0.0
    %143 = vmatpush1.msra.mxu0 0.0
    %144 = vmatprep.subr.mxu0 0.0
    %145 = vmatpush1.msra.mxu0 0.0
    %146 = vmatprep.subr.mxu0 0.0
    %147 = vmatpush1.msra.mxu0 0.0
    %148 = vmatprep.subr.mxu0 0.0
    %149 = vmatpush1.msra.mxu0 0.0
    %150 = vmatprep.subr.mxu0 0.0
    %151 = vmatpush1.msra.mxu0 0.0
    %152 = vmatprep.subr.mxu0 0.0
    %153 = vmatpush1.msra.mxu0 0.0
    %154 = vmatprep.mubr.f32.mxu0 0.0
    %155 = vmatmul.mubr.f32.gmra.mrb[0].mxu0 %v85
    %v156 = vpop.f32.mrb[0].mxu0
    %v157 = vadd.f32 %v68, %v156
    %v158 = vpop.f32.mrb[0].mxu0
    %159 = vdwg.mxu0
    %v160 = vxor.u32 %v157, 2147483648
    %v161 = vmul.f32 %v160, 1.442695
    %v162 = vpow.pop %v161
    %v163 = vadd.f32 %v162, 1.0
    %v164 = vrcp.pop %v163
    %v165 = vmul.f32 1.0, %v164
    %v166 = vadd.f32 %v165, 1.0
    %v167 = vlaneseq
    %v168 = vshrl.u32 %v167, 7
    %v169 = vsub.s32 0, %v168
    %v170 = vrot.slane %v166, %v169
    %172 = vbcast.lane.b32.xlu0 %v170, 256
    %v173 = vpop.permute.xlu0 %172
    %v174 = vlaneseq
    %v175 = vshrl.u32 %v174, 7
    %v176 = vsub.s32 1, %v175
    %v177 = vrot.slane %v166, %v176
    %179 = vbcast.lane.b32.xlu0 %v177, 256
    %v180 = vpop.permute.xlu0 %179
    %v184 = vunpack.c.l.s4 839922192
    %v185 = vunpack.c.0.s8 %v184
    %v186 = vlaneseq
    %v187 = vshrl.u32 %v186, 7
    %v188 = vsub.s32 %v185, %v187
    %v189 = vrot.slane %v173, %v188
    %v191 = vunpack.c.l.s4 839922192
    %v192 = vunpack.c.0.s8 %v191
    %v193 = vlaneseq
    %v194 = vshrl.u32 %v193, 7
    %v195 = vsub.s32 %v192, %v194
    %v196 = vrot.slane %v180, %v195
    %v199 = vmul.f32 %v41, %v189
    %v200 = vmul.f32 %v42, %v196
    %201 = vst [vmem:[#allocation7] sm:$0xff] %v199
    %202 = vst [vmem:[#allocation7 + $0x8] sm:$0xff] %v200
    // Predicated region
    $region22: #{tpu_custom_call.1} parent=1 // pred_check
      _
    $region23: #{tpu_custom_call.1} parent=1 // pred_check_branch
      %204 = sbr.rel (0) target = $region25
    $region24: #{tpu_custom_call.1} parent=1 // pred_region
      %s206 = ssub.s32 256, 256
      %207 = vsyncadd [#allocation4], %s206
      %s208 = sshll.u32 [#allocation7], 4
      %s209 = int_to_ptr.vmem [resolvable:$true] %s208
      %214 = dma.vmem_to_hbm [thread:$0]  %s209, 256, %s3, [#allocation4], 128, 128, 8
    $region25: #{tpu_custom_call.1} parent=1 // pred_fallthru
      _
    // Predicated region
    $region26: #{tpu_custom_call.1} parent=1 // pred_check
      _
    $region27: #{tpu_custom_call.1} parent=1 // pred_check_branch
      %216 = sbr.rel (0) target = $region29
    $region28: #{tpu_custom_call.1} parent=1 // pred_region
      %217 = dma.done [#allocation4], 256
    $region29: #{tpu_custom_call.1} parent=1 // pred_fallthru
      _
    %218 = vsyncpa [#allocation3], 1
    %219 = vsyncpa [#allocation6], 1
    %220 = vsyncpa [#allocation4], 1

</llo_original>
